<compile_context>
chip_gen: v5e
topology: v5e:2x2
jax: 0.10.0
libtpu: 0.0.40
codegen_flags: <defaults>
</compile_context>

<pallas_src>
import functools

import jax
import jax.numpy as jnp
from jax import lax
from jax.experimental import pallas as pl
from jax.experimental.pallas import tpu as pltpu


# ----------------------------------------------------------------------------
# Pallas kernel: `nb` images per grid step, whole residual block fused.
# ----------------------------------------------------------------------------
def _residual_block_kernel(x_ref, t1_ref, t2_ref, sh_ref, o_ref, *, nb, Ho, WC):
    """x_ref : (nb, 3, Ho, lane_in) bf16 -- per-di conv1 row slabs, lane = wpad*Cin + ci
       t1_ref: (3*lane_in, WC)      bf16 -- conv1 block-Toeplitz weights (BN1 scale folded)
       t2_ref: (3*WC + lane_in, WC) bf16 -- conv2 + fused 1x1-skip weights (scales folded)
       sh_ref: (2, WC)              f32  -- row 0: BN1 shift, row 1: BN2 + BN_skip shift
       o_ref : (nb, Ho, WC)         f32
    """
    bf16 = jnp.bfloat16
    f32 = jnp.float32

    # ---- conv1 (+BN1 scale): one lane-dense MXU matmul over all nb images ----
    slabs1, skip_slabs = [], []
    for b in range(nb):
        d0, d1, d2 = x_ref[b, 0], x_ref[b, 1], x_ref[b, 2]
        slabs1.append(jnp.concatenate([d0, d1, d2], axis=-1))   # (Ho, 3*lane_in)
        skip_slabs.append(d1)                                   # center rows feed the 1x1 skip
    p1 = slabs1[0] if nb == 1 else jnp.concatenate(slabs1, axis=0)
    acc1 = jnp.dot(p1, t1_ref[...], preferred_element_type=f32)  # (nb*Ho, WC)

    # BN1 shift + leaky_relu(0.1); the BN1 scale is already folded into t1
    h1 = acc1 + sh_ref[0:1]
    h1 = jnp.where(h1 > 0, h1, 0.1 * h1).astype(bf16)

    # ---- conv2 (+BN2 scale) fused with the 1x1 skip (+BN_skip scale) ---------
    zrow = jnp.zeros((1, WC), bf16)
    slabs2 = []
    for b in range(nb):
        hb = h1[b * Ho:(b + 1) * Ho]
        hp = jnp.concatenate([zrow, hb, zrow], axis=0)           # (Ho+2, WC) zero-row halo
        slabs2.append(jnp.concatenate(
            [hp[0:Ho], hp[1:Ho + 1], hp[2:Ho + 2], skip_slabs[b]], axis=-1))
    p2 = slabs2[0] if nb == 1 else jnp.concatenate(slabs2, axis=0)
    acc2 = jnp.dot(p2, t2_ref[...], preferred_element_type=f32)  # (nb*Ho, WC)

    # BN2 + BN_skip shifts (residual add already inside acc2) + leaky_relu(0.1)
    out = acc2 + sh_ref[1:2]
    out = jnp.where(out > 0, out, 0.1 * out)
    o_ref[...] = out.reshape(nb, Ho, WC).astype(o_ref.dtype)     # lane-dense store


# ----------------------------------------------------------------------------
# Wrapper: layout plumbing, BN folding, block-Toeplitz weight construction.
# ----------------------------------------------------------------------------
def _fold_bn(conv_bias, gamma, beta, mean, var, eps=1e-5):
    scale = gamma / jnp.sqrt(var + eps)
    shift = (conv_bias - mean) * scale + beta
    return scale.astype(jnp.float32), shift.astype(jnp.float32)


def _band_selector(n_src, n_dst, src_of_dst):
    """(n_src, n_dst) 0/1 matrix with a 1 at (src_of_dst[j], j) when the source is in range."""
    j = jnp.arange(n_dst)
    valid = (src_of_dst >= 0) & (src_of_dst < n_src)
    m = jnp.zeros((n_src, n_dst), jnp.float32)
    return m.at[jnp.clip(src_of_dst, 0, n_src - 1), j].add(valid.astype(jnp.float32))


def residual_block_forward(x_nchw, params, stride=1, images_per_step=None):
    N, Cin, H, W = x_nchw.shape
    Cout = params["w1"].shape[0]
    Ho = (H + 2 - 3) // stride + 1
    Wo = (W + 2 - 3) // stride + 1
    WC = Wo * Cout
    lane_in = -(-((W + 2) * Cin) // 128) * 128          # pad input lane dim to a 128 multiple

    # images per grid step: amortize per-step overhead, but keep >=2 parallel steps (v7x: 2 TCs)
    if images_per_step is None:
        images_per_step = max(1, min(8, N // 2))
    nb = max(1, min(images_per_step, N))
    while N % nb != 0:
        nb -= 1
    num_steps = N // nb

    # ---- lane-dense zero-padded input + per-di row gather (any stride, one kernel path) ----
    x_nhwc = jnp.transpose(x_nchw, (0, 2, 3, 1))
    xpad = jnp.pad(x_nhwc, ((0, 0), (1, 1), (1, 1), (0, 0)))
    x_dense = xpad.reshape(N, H + 2, (W + 2) * Cin)
    x_dense = jnp.pad(x_dense, ((0, 0), (0, 0), (0, lane_in - (W + 2) * Cin)))
    row_idx = jnp.arange(Ho)[None, :] * stride + jnp.arange(3)[:, None]      # (3, Ho)
    x_rows = x_dense[:, row_idx, :].astype(jnp.bfloat16)                     # (N, 3, Ho, lane_in)

    # ---- fold BN into scale/shift, then fold the scales into the weights -------------------
    s1, b1 = _fold_bn(params["b1"], *params["bn1"])
    s2, b2 = _fold_bn(params["b2"], *params["bn2"])
    ss, bs = _fold_bn(params["bskip"], *params["bn_skip"])

    w1 = jnp.transpose(params["w1"], (2, 3, 1, 0))               # (3,3,Cin,Cout)
    w2 = jnp.transpose(params["w2"], (2, 3, 1, 0))               # (3,3,Cout,Cout)
    wsk = jnp.transpose(params["wskip"][:, :, 0, 0], (1, 0))     # (Cin,Cout)

    cols = jnp.arange(Wo)

    # conv1 block-Toeplitz weights: one (lane_in, WC) band per di, BN1 scale folded in
    t1_blocks = []
    for di in range(3):
        t = jnp.zeros(((W + 2) * Cin, WC), jnp.float32)
        for dj in range(3):
            sel = _band_selector(W + 2, Wo, cols * stride + dj)
            t = t + jnp.kron(sel, w1[di, dj] * s1[None, :])
        t1_blocks.append(jnp.pad(t, ((0, lane_in - (W + 2) * Cin), (0, 0))))
    t1 = jnp.concatenate(t1_blocks, axis=0).astype(jnp.bfloat16)             # (3*lane_in, WC)

    # conv2 block-Toeplitz weights (zero col-padding baked into the band) + fused 1x1 skip
    t2_blocks = []
    for di in range(3):
        t = jnp.zeros((WC, WC), jnp.float32)
        for dj in range(3):
            sel = _band_selector(Wo, Wo, cols + dj - 1)
            t = t + jnp.kron(sel, w2[di, dj] * s2[None, :])
        t2_blocks.append(t)
    tsk = jnp.kron(_band_selector(W + 2, Wo, cols * stride + 1), wsk * ss[None, :])
    t2_blocks.append(jnp.pad(tsk, ((0, lane_in - (W + 2) * Cin), (0, 0))))
    t2 = jnp.concatenate(t2_blocks, axis=0).astype(jnp.bfloat16)             # (3*WC+lane_in, WC)

    # remaining per-channel shifts, tiled lane-dense, stacked into ONE constant input
    shifts = jnp.stack([jnp.tile(b1, Wo), jnp.tile(b2 + bs, Wo)]).astype(jnp.float32)

    kernel = functools.partial(_residual_block_kernel, nb=nb, Ho=Ho, WC=WC)

    out_dense = pl.pallas_call(
        kernel,
        out_shape=jax.ShapeDtypeStruct((N, Ho, WC), jnp.float32),
        grid=(num_steps,),
        in_specs=[
            pl.BlockSpec((nb, 3, Ho, lane_in), lambda g: (g, 0, 0, 0)),
            pl.BlockSpec((3 * lane_in, WC), lambda g: (0, 0)),
            pl.BlockSpec((3 * WC + lane_in, WC), lambda g: (0, 0)),
            pl.BlockSpec((2, WC), lambda g: (0, 0)),
        ],
        out_specs=pl.BlockSpec((nb, Ho, WC), lambda g: (g, 0, 0)),
        compiler_params=pltpu.CompilerParams(dimension_semantics=("parallel",)),
    )(x_rows, t1, t2, shifts)

    # lane-dense slab -> NHWC -> PyTorch NCHW
    out_nhwc = out_dense.reshape(N, Ho, Wo, Cout)
    return jnp.transpose(out_nhwc, (0, 3, 1, 2))


# ----------------------------------------------------------------------------
# Pure-JAX reference (mirrors the PyTorch forward exactly, eval mode, f32).
# ----------------------------------------------------------------------------
def _conv_ref(x, w, b, stride, pad):
    y = lax.conv_general_dilated(x, w, (stride, stride),
                                 [(pad, pad), (pad, pad)],
                                 dimension_numbers=("NCHW", "OIHW", "NCHW"))
    return y + b[None, :, None, None]


def _bn_ref(x, gamma, beta, mean, var, eps=1e-5):
    inv = gamma / jnp.sqrt(var + eps)
    return (x - mean[None, :, None, None]) * inv[None, :, None, None] + beta[None, :, None, None]


def residual_block_reference(x, p, stride=1):
    out = _conv_ref(x, p["w1"], p["b1"], stride, 1)
    out = _bn_ref(out, *p["bn1"])
    out = jnp.where(out > 0, out, 0.1 * out)
    out = _conv_ref(out, p["w2"], p["b2"], 1, 1)
    out = _bn_ref(out, *p["bn2"])
    identity = _conv_ref(x, p["wskip"], p["bskip"], stride, 0)
    identity = _bn_ref(identity, *p["bn_skip"])
    out = out + identity
    return jnp.where(out > 0, out, 0.1 * out)


# ----------------------------------------------------------------------------
if __name__ == "__main__":
    key = jax.random.PRNGKey(0)
    N, Cin, Cout, H, W = 2, 4, 8, 16, 16
    ks = list(jax.random.split(key, 20))

    def nrm(k, shape, s=0.2):
        return (s * jax.random.normal(k, shape)).astype(jnp.float32)

    def bn_params(k):
        k1, k2, k3, k4 = jax.random.split(k, 4)
        gamma = 1.0 + 0.1 * jax.random.normal(k1, (Cout,))
        beta = 0.1 * jax.random.normal(k2, (Cout,))
        mean = 0.1 * jax.random.normal(k3, (Cout,))
        var = 0.5 + jnp.abs(jax.random.normal(k4, (Cout,)))
        return (gamma.astype(jnp.float32), beta.astype(jnp.float32),
                mean.astype(jnp.float32), var.astype(jnp.float32))

    params = {
        "w1": nrm(ks[0], (Cout, Cin, 3, 3)), "b1": nrm(ks[1], (Cout,)),
        "bn1": bn_params(ks[2]),
        "w2": nrm(ks[3], (Cout, Cout, 3, 3)), "b2": nrm(ks[4], (Cout,)),
        "bn2": bn_params(ks[5]),
        "wskip": nrm(ks[6], (Cout, Cin, 1, 1)), "bskip": nrm(ks[7], (Cout,)),
        "bn_skip": bn_params(ks[8]),
    }

    x = jax.random.normal(ks[9], (N, Cin, H, W), dtype=jnp.float32)

    # exercise both the stride=1 and stride=2 paths (review correctness concern)
    for stride in (1, 2):
        out = jax.block_until_ready(residual_block_forward(x, params, stride=stride))
        ref = residual_block_reference(x, params, stride=stride)
        assert out.shape == ref.shape, (stride, out.shape, ref.shape)
        # bf16 matmul operands (f32 accumulation) -> absolute + relative-RMS checks
        max_err = float(jnp.max(jnp.abs(out - ref)))
        rel_rms = float(jnp.sqrt(jnp.mean((out - ref) ** 2) /
                                 (jnp.mean(ref ** 2) + 1e-12)))
        assert max_err < 1e-1, (stride, max_err)
        assert rel_rms < 3e-2, (stride, rel_rms)

    print("KERNEL_OK")
</pallas_src>

<mosaic_0001>
module attributes {stable_mosaic.version = 11 : i64} {
  func.func @_residual_block_kernel(%arg0: i32, %arg1: memref<1x3x16x128xbf16, #tpu.memory_space<vmem>>, %arg2: memref<384x128xbf16, #tpu.memory_space<vmem>>, %arg3: memref<512x128xbf16, #tpu.memory_space<vmem>>, %arg4: memref<2x128xf32, #tpu.memory_space<vmem>>, %arg5: memref<1x16x128xf32, #tpu.memory_space<vmem>>) attributes {dimension_semantics = [#tpu.dimension_semantics<parallel>], iteration_bounds = array<i64: 2>, scalar_prefetch = 0 : i64, scratch_operands = 0 : i64, tpu.core_type = #tpu.core_type<tc>, window_params = [{transform_indices = @transform_0, window_bounds = array<i64: 1, 3, 16, 128>}, {pipeline_mode = #tpu.pipeline_mode<synchronous>, transform_indices = @transform_1, window_bounds = array<i64: 384, 128>}, {pipeline_mode = #tpu.pipeline_mode<synchronous>, transform_indices = @transform_2, window_bounds = array<i64: 512, 128>}, {pipeline_mode = #tpu.pipeline_mode<synchronous>, transform_indices = @transform_3, window_bounds = array<i64: 2, 128>}, {transform_indices = @transform_4, window_bounds = array<i64: 1, 16, 128>}]} {
    %c0 = arith.constant 0 : index
    %c0_0 = arith.constant 0 : index
    %c0_1 = arith.constant 0 : index
    %c0_2 = arith.constant 0 : index
    %0 = vector.load %arg1[%c0, %c0_0, %c0_1, %c0_2] : memref<1x3x16x128xbf16, #tpu.memory_space<vmem>>, vector<1x1x16x128xbf16>
    %1 = vector.shape_cast %0 : vector<1x1x16x128xbf16> to vector<16x128xbf16>
    %c0_3 = arith.constant 0 : index
    %c1 = arith.constant 1 : index
    %c0_4 = arith.constant 0 : index
    %c0_5 = arith.constant 0 : index
    %2 = vector.load %arg1[%c0_3, %c1, %c0_4, %c0_5] : memref<1x3x16x128xbf16, #tpu.memory_space<vmem>>, vector<1x1x16x128xbf16>
    %3 = vector.shape_cast %2 : vector<1x1x16x128xbf16> to vector<16x128xbf16>
    %c0_6 = arith.constant 0 : index
    %c2 = arith.constant 2 : index
    %c0_7 = arith.constant 0 : index
    %c0_8 = arith.constant 0 : index
    %4 = vector.load %arg1[%c0_6, %c2, %c0_7, %c0_8] : memref<1x3x16x128xbf16, #tpu.memory_space<vmem>>, vector<1x1x16x128xbf16>
    %5 = vector.shape_cast %4 : vector<1x1x16x128xbf16> to vector<16x128xbf16>
    %6 = tpu.concatenate %1, %3, %5 in 1 : vector<16x128xbf16>, vector<16x128xbf16>, vector<16x128xbf16> -> vector<16x384xbf16>
    %c0_9 = arith.constant 0 : index
    %c0_10 = arith.constant 0 : index
    %7 = vector.load %arg2[%c0_9, %c0_10] : memref<384x128xbf16, #tpu.memory_space<vmem>>, vector<384x128xbf16>
    %cst = arith.constant dense<0.000000e+00> : vector<16x128xf32>
    %8 = tpu.matmul %6, %7, %cst {dimension_numbers = #tpu.dot_dimension_numbers<[1], [0], [0], [1], [0, 0, 1, 1], [], []>} : vector<16x384xbf16>, vector<384x128xbf16>, vector<16x128xf32> -> vector<16x128xf32>
    %c0_11 = arith.constant 0 : index
    %c0_12 = arith.constant 0 : index
    %9 = vector.load %arg4[%c0_11, %c0_12] : memref<2x128xf32, #tpu.memory_space<vmem>>, vector<1x128xf32>
    %10 = vector.broadcast %9 : vector<1x128xf32> to vector<16x128xf32>
    %11 = arith.addf %8, %10 : vector<16x128xf32>
    %cst_13 = arith.constant 0.000000e+00 : f32
    %12 = vector.broadcast %cst_13 : f32 to vector<16x128xf32>
    %13 = arith.cmpf ogt, %11, %12 : vector<16x128xf32>
    %cst_14 = arith.constant 1.000000e-01 : f32
    %14 = vector.broadcast %cst_14 : f32 to vector<16x128xf32>
    %15 = arith.mulf %14, %11 : vector<16x128xf32>
    %16 = arith.select %13, %11, %15 : vector<16x128xi1>, vector<16x128xf32>
    %17 = arith.truncf %16 : vector<16x128xf32> to vector<16x128xbf16>
    %cst_15 = arith.constant 0.000000e+00 : bf16
    %18 = vector.broadcast %cst_15 : bf16 to vector<1x128xbf16>
    %19 = tpu.concatenate %18, %17, %18 in 0 : vector<1x128xbf16>, vector<16x128xbf16>, vector<1x128xbf16> -> vector<18x128xbf16>
    %20 = vector.extract_strided_slice %19 {offsets = [0, 0], sizes = [16, 128], strides = [1, 1]} : vector<18x128xbf16> to vector<16x128xbf16>
    %21 = vector.extract_strided_slice %19 {offsets = [1, 0], sizes = [16, 128], strides = [1, 1]} : vector<18x128xbf16> to vector<16x128xbf16>
    %22 = vector.extract_strided_slice %19 {offsets = [2, 0], sizes = [16, 128], strides = [1, 1]} : vector<18x128xbf16> to vector<16x128xbf16>
    %23 = tpu.concatenate %20, %21, %22, %3 in 1 : vector<16x128xbf16>, vector<16x128xbf16>, vector<16x128xbf16>, vector<16x128xbf16> -> vector<16x512xbf16>
    %c0_16 = arith.constant 0 : index
    %c0_17 = arith.constant 0 : index
    %24 = vector.load %arg3[%c0_16, %c0_17] : memref<512x128xbf16, #tpu.memory_space<vmem>>, vector<512x128xbf16>
    %cst_18 = arith.constant dense<0.000000e+00> : vector<16x128xf32>
    %25 = tpu.matmul %23, %24, %cst_18 {dimension_numbers = #tpu.dot_dimension_numbers<[1], [0], [0], [1], [0, 0, 1, 1], [], []>} : vector<16x512xbf16>, vector<512x128xbf16>, vector<16x128xf32> -> vector<16x128xf32>
    %c1_19 = arith.constant 1 : index
    %c0_20 = arith.constant 0 : index
    %26 = vector.load %arg4[%c1_19, %c0_20] : memref<2x128xf32, #tpu.memory_space<vmem>>, vector<1x128xf32>
    %27 = vector.broadcast %26 : vector<1x128xf32> to vector<16x128xf32>
    %28 = arith.addf %25, %27 : vector<16x128xf32>
    %cst_21 = arith.constant 0.000000e+00 : f32
    %29 = vector.broadcast %cst_21 : f32 to vector<16x128xf32>
    %30 = arith.cmpf ogt, %28, %29 : vector<16x128xf32>
    %cst_22 = arith.constant 1.000000e-01 : f32
    %31 = vector.broadcast %cst_22 : f32 to vector<16x128xf32>
    %32 = arith.mulf %31, %28 : vector<16x128xf32>
    %33 = arith.select %30, %28, %32 : vector<16x128xi1>, vector<16x128xf32>
    %34 = vector.shape_cast %33 : vector<16x128xf32> to vector<1x16x128xf32>
    %c0_23 = arith.constant 0 : index
    %c0_24 = arith.constant 0 : index
    %c0_25 = arith.constant 0 : index
    %35 = vector.load %arg5[%c0_23, %c0_24, %c0_25] : memref<1x16x128xf32, #tpu.memory_space<vmem>>, vector<1x16x128xf32>
    tpu.vector_store %arg5[%c0_23, %c0_24, %c0_25], %34 {strides = array<i32>} : memref<1x16x128xf32, #tpu.memory_space<vmem>>, vector<1x16x128xf32>,
    return
  }
  func.func @transform_0(%arg0: i32) -> (i32, i32, i32, i32) {
    %c0_i32 = arith.constant 0 : i32
    %c0_i32_0 = arith.constant 0 : i32
    %c0_i32_1 = arith.constant 0 : i32
    %c0_i32_2 = arith.constant 0 : i32
    return %arg0, %c0_i32, %c0_i32_0, %c0_i32_1 : i32, i32, i32, i32
  }
  func.func @transform_1(%arg0: i32) -> (i32, i32) {
    %c0_i32 = arith.constant 0 : i32
    %c0_i32_0 = arith.constant 0 : i32
    %c0_i32_1 = arith.constant 0 : i32
    return %c0_i32, %c0_i32_0 : i32, i32
  }
  func.func @transform_2(%arg0: i32) -> (i32, i32) {
    %c0_i32 = arith.constant 0 : i32
    %c0_i32_0 = arith.constant 0 : i32
    %c0_i32_1 = arith.constant 0 : i32
    return %c0_i32, %c0_i32_0 : i32, i32
  }
  func.func @transform_3(%arg0: i32) -> (i32, i32) {
    %c0_i32 = arith.constant 0 : i32
    %c0_i32_0 = arith.constant 0 : i32
    %c0_i32_1 = arith.constant 0 : i32
    return %c0_i32, %c0_i32_0 : i32, i32
  }
  func.func @transform_4(%arg0: i32) -> (i32, i32, i32) {
    %c0_i32 = arith.constant 0 : i32
    %c0_i32_0 = arith.constant 0 : i32
    %c0_i32_1 = arith.constant 0 : i32
    return %arg0, %c0_i32, %c0_i32_0 : i32, i32, i32
  }
}

</mosaic_0001>

<llo_original>
// kernel: tpu_custom_call.1
$region0: #{tpu_custom_call.1}
  #allocation0 [shape = 'u32[]', space=smem, size = 0x4, offset = 0x4, fixed_abs, tag = 'smem constant byte address 0x4 - core index']
  #allocation1 [shape = 'u32[72,128]{1,0:T(1,128)}', space=vmem, size = 0x9000, scoped, tag = 'internal scratch']
  %s0 = inlined_call_operand.hbm [shape: bf16[2,3,16,128], index: 0, kind: input, shape index: {}]
  %s1 = inlined_call_operand.hbm [shape: bf16[384,128], index: 1, kind: input, shape index: {}]
  %s2 = inlined_call_operand.hbm [shape: bf16[512,128], index: 2, kind: input, shape index: {}]
  %s3 = inlined_call_operand.vmem [shape: f32[2,128], index: 3, kind: input, shape index: {}]
  %s4 = inlined_call_operand.hbm [shape: f32[2,16,128], index: 4, kind: output, shape index: {}]
  %s5 = sld [smem:[#allocation0]]
  $region61: #{tpu_custom_call.1} parent=0
    _
  %s7 = ssub.s32 1, %s5
  %s8 = scalar_select 0, %s7, %s5
  $region1: #{tpu_custom_call.1} parent=0
    #allocation2 [shape = 'u8[24576]{0}', space=vmem, size = 0x6000, scoped, tag = 'input window, operand 0']
    #allocation3 [shape = 's32[2]{0}', space=sflag, size = 0x8, scoped, tag = 'scoped memory for tpu_custom_call.1']
    #allocation4 [shape = 's32[2]{0}', space=sflag, size = 0x8, scoped, tag = 'scoped memory for tpu_custom_call.1']
    #allocation5 [shape = 'u8[98304]{0}', space=vmem, size = 0x18000, scoped, tag = 'input window, operand 1, single buffered']
    #allocation6 [shape = 's32[1]{0}', space=sflag, size = 0x4, scoped, tag = 'scoped memory for tpu_custom_call.1']
    #allocation7 [shape = 'u8[131072]{0}', space=vmem, size = 0x20000, scoped, tag = 'input window, operand 2, single buffered']
    #allocation8 [shape = 'u8[16384]{0}', space=vmem, size = 0x4000, scoped, tag = 'output window, operand 0']
    %9 = vsyncpa [#allocation3], 0
    %s10 = scalar_lea.sflag [#allocation3], 1
    %11 = vsyncpa %s10, 0
    %12 = vsyncpa [#allocation6], 0
    %13 = vsyncpa [#allocation4], 0
    %s14 = scalar_lea.sflag [#allocation4], 1
    %15 = vsyncpa %s14, 0
    loop: start=0, step=1, limit=4
    $region2: #{tpu_custom_call.1} parent=1 // loop_pre_header
      _
    $region3: #{tpu_custom_call.1} parent=1 // loop_header
      %s17 = sphi 0, %s21
      %p18 = scmp.ge.s32.totalorder %s17, 4
      %s27 = sphi 0, %s29
      %s30 = sphi 0, %s27
      %s31 = sphi 0, %s30
      %s47 = sphi 0, %s31
      %s51 = sphi 0, %s51
      %s53 = sphi 0, %s51
      %s54 = sphi 0, %s53
      %s68 = sphi 0, %s54
      %s72 = sphi 0, %s72
      %s74 = sphi 0, %s72
      %s75 = sphi 0, %s74
      %s89 = sphi 0, %s75
      %s93 = sphi 0, %s93
      %s95 = sphi 0, %s93
      %s96 = sphi 0, %s95
      %s110 = sphi 0, %s96
      %s116 = sphi 0, %s118
      %s119 = sphi 0, %s116
      %s120 = sphi 0, %s119
      %s136 = sphi 0, %s120
    $region4: #{tpu_custom_call.1} parent=1 // loop_header_branch
      %20 = sbr.rel (%p18) target = $region8
    $region5: #{tpu_custom_call.1} parent=1 // loop_body
      %s22 = ssub.s32 %s17, 1
      %s23 = ssub.s32 %s17, 2
      %s24 = sadd.s32 %s17, 1
      %s25 = ssub.s32 %s17, %s24
      %p26 = scmp.eq.s32.totalorder %s25, 0
      %s28 = sadd.s32 %s27, 1
      %s29 = scalar_select %p26, %s27, %s28
      %p32 = pneg %p26
      %p33 = scmp.eq.s32.totalorder %s17, 1
      %p34 = por %p32, %p33
      %p35 = scmp.ne.s32.totalorder %s27, %s30
      %p36 = scmp.eq.s32.totalorder %s17, 0
      %p37 = por %p35, %p36
      %p38 = scmp.ne.s32.totalorder %s27, %s30
      %p39 = scmp.eq.s32.totalorder %s22, 1
      %p40 = por %p38, %p39
      %p41 = scmp.ne.s32.totalorder %s30, %s31
      %p42 = scmp.eq.s32.totalorder %s22, 0
      %p43 = por %p41, %p42
      %p44 = scmp.ne.s32.totalorder %s30, %s31
      %p45 = scmp.eq.s32.totalorder %s23, 1
      %p46 = por %p44, %p45
      %p48 = scmp.ne.s32.totalorder %s31, %s47
      %p49 = scmp.eq.s32.totalorder %s23, 0
      %p50 = por %p48, %p49
      %s52 = sadd.s32 %s51, 1
      %p55 = scmp.eq.s32.totalorder %s17, 1
      %p56 = scmp.ne.s32.totalorder %s51, %s53
      %p57 = scmp.eq.s32.totalorder %s17, 0
      %p58 = por %p56, %p57
      %p59 = scmp.ne.s32.totalorder %s51, %s53
      %p60 = scmp.eq.s32.totalorder %s22, 1
      %p61 = por %p59, %p60
      %p62 = scmp.ne.s32.totalorder %s53, %s54
      %p63 = scmp.eq.s32.totalorder %s22, 0
      %p64 = por %p62, %p63
      %p65 = scmp.ne.s32.totalorder %s53, %s54
      %p66 = scmp.eq.s32.totalorder %s23, 1
      %p67 = por %p65, %p66
      %p69 = scmp.ne.s32.totalorder %s54, %s68
      %p70 = scmp.eq.s32.totalorder %s23, 0
      %p71 = por %p69, %p70
      %s73 = sadd.s32 %s72, 1
      %p76 = scmp.eq.s32.totalorder %s17, 1
      %p77 = scmp.ne.s32.totalorder %s72, %s74
      %p78 = scmp.eq.s32.totalorder %s17, 0
      %p79 = por %p77, %p78
      %p80 = scmp.ne.s32.totalorder %s72, %s74
      %p81 = scmp.eq.s32.totalorder %s22, 1
      %p82 = por %p80, %p81
      %p83 = scmp.ne.s32.totalorder %s74, %s75
      %p84 = scmp.eq.s32.totalorder %s22, 0
      %p85 = por %p83, %p84
      %p86 = scmp.ne.s32.totalorder %s74, %s75
      %p87 = scmp.eq.s32.totalorder %s23, 1
      %p88 = por %p86, %p87
      %p90 = scmp.ne.s32.totalorder %s75, %s89
      %p91 = scmp.eq.s32.totalorder %s23, 0
      %p92 = por %p90, %p91
      %s94 = sadd.s32 %s93, 1
      %p97 = scmp.eq.s32.totalorder %s17, 1
      %p98 = scmp.ne.s32.totalorder %s93, %s95
      %p99 = scmp.eq.s32.totalorder %s17, 0
      %p100 = por %p98, %p99
      %p101 = scmp.ne.s32.totalorder %s93, %s95
      %p102 = scmp.eq.s32.totalorder %s22, 1
      %p103 = por %p101, %p102
      %p104 = scmp.ne.s32.totalorder %s95, %s96
      %p105 = scmp.eq.s32.totalorder %s22, 0
      %p106 = por %p104, %p105
      %p107 = scmp.ne.s32.totalorder %s95, %s96
      %p108 = scmp.eq.s32.totalorder %s23, 1
      %p109 = por %p107, %p108
      %p111 = scmp.ne.s32.totalorder %s96, %s110
      %p112 = scmp.eq.s32.totalorder %s23, 0
      %p113 = por %p111, %p112
      %s114 = ssub.s32 %s17, %s24
      %p115 = scmp.eq.s32.totalorder %s114, 0
      %s117 = sadd.s32 %s116, 1
      %s118 = scalar_select %p115, %s116, %s117
      %p121 = pneg %p115
      %p122 = scmp.eq.s32.totalorder %s17, 1
      %p123 = por %p121, %p122
      %p124 = scmp.ne.s32.totalorder %s116, %s119
      %p125 = scmp.eq.s32.totalorder %s17, 0
      %p126 = por %p124, %p125
      %p127 = scmp.ne.s32.totalorder %s116, %s119
      %p128 = scmp.eq.s32.totalorder %s22, 1
      %p129 = por %p127, %p128
      %p130 = scmp.ne.s32.totalorder %s119, %s120
      %p131 = scmp.eq.s32.totalorder %s22, 0
      %p132 = por %p130, %p131
      %p133 = scmp.ne.s32.totalorder %s119, %s120
      %p134 = scmp.eq.s32.totalorder %s23, 1
      %p135 = por %p133, %p134
      %p137 = scmp.ne.s32.totalorder %s120, %s136
      %p138 = scmp.eq.s32.totalorder %s23, 0
      %p139 = por %p137, %p138
      %p140 = scmp.le.s32.totalorder 1, %s17
      %p141 = scmp.lt.s32.totalorder %s17, 3
      %p142 = pnand %p140, %p141
      %p143 = pneg %p142
      // Predicated region
      $region9: #{tpu_custom_call.1} parent=5 // pred_check
        _
      $region10: #{tpu_custom_call.1} parent=5 // pred_check_branch
        %145 = sbr.rel (%p142) target = $region12
      $region11: #{tpu_custom_call.1} parent=5 // pred_region
        %s146 = ssub.s32 %s17, 1
        // Predicated region
        $region13: #{tpu_custom_call.1} parent=11 // pred_check
          %p147 = pneg %p64
        $region14: #{tpu_custom_call.1} parent=11 // pred_check_branch
          %149 = sbr.rel (%p147) target = $region16
        $region15: #{tpu_custom_call.1} parent=11 // pred_region
          %151 = vsyncadd [#allocation6], 0
          %s152 = sshll.u32 %s1, 4
          %s153 = int_to_ptr.hbm [resolvable:$true] %s152
          %s154 = sshll.u32 [#allocation5], 4
          %s155 = int_to_ptr.vmem [resolvable:$true] %s154
          %160 = dma.hbm_to_vmem [thread:$0]  %s153, 3072, %s155, [#allocation6], 64, 64, 4
        $region16: #{tpu_custom_call.1} parent=11 // pred_fallthru
          _
        // Predicated region
        $region17: #{tpu_custom_call.1} parent=11 // pred_check
          %p161 = pneg %p85
        $region18: #{tpu_custom_call.1} parent=11 // pred_check_branch
          %163 = sbr.rel (%p161) target = $region20
        $region19: #{tpu_custom_call.1} parent=11 // pred_region
          %165 = vsyncadd [#allocation6], 0
          %s166 = sshll.u32 %s2, 4
          %s167 = int_to_ptr.hbm [resolvable:$true] %s166
          %s168 = sshll.u32 [#allocation7], 4
          %s169 = int_to_ptr.vmem [resolvable:$true] %s168
          %174 = dma.hbm_to_vmem [thread:$0]  %s167, 4096, %s169, [#allocation6], 64, 64, 4
        $region20: #{tpu_custom_call.1} parent=11 // pred_fallthru
          _
        // Predicated region
        $region21: #{tpu_custom_call.1} parent=11 // pred_check
          %p175 = pneg %p106
        $region22: #{tpu_custom_call.1} parent=11 // pred_check_branch
          %177 = sbr.rel (%p175) target = $region24
        $region23: #{tpu_custom_call.1} parent=11 // pred_region
          _
        $region24: #{tpu_custom_call.1} parent=11 // pred_fallthru
          _
      $region12: #{tpu_custom_call.1} parent=5 // pred_fallthru
        _
      %p178 = scmp.lt.s32.totalorder %s17, 2
      // Predicated region
      $region25: #{tpu_custom_call.1} parent=5 // pred_check
        %p179 = pneg %p178
      $region26: #{tpu_custom_call.1} parent=5 // pred_check_branch
        %181 = sbr.rel (%p179) target = $region28
      $region27: #{tpu_custom_call.1} parent=5 // pred_region
        // Predicated region
        $region29: #{tpu_custom_call.1} parent=27 // pred_check
          %p182 = pneg %p37
        $region30: #{tpu_custom_call.1} parent=27 // pred_check_branch
          %184 = sbr.rel (%p182) target = $region32
        $region31: #{tpu_custom_call.1} parent=27 // pred_region
          %s185 = sand.u32 %s27, 1
          %s186 = scalar_lea.sflag [#allocation3], %s185
          %s187 = sand.u32 %s27, 1
          %s188 = smul.addr %s187, 24
          %s189 = scalar_lea.vmem [#allocation2], %s188
          %191 = vsyncadd %s186, 0
          %s192 = smul.addr %s17, 6
          %s193 = smul.addr %s192, 4
          %s194 = scalar_lea.hbm %s0, %s193
          %s195 = sshll.u32 %s194, 4
          %s196 = int_to_ptr.hbm [resolvable:$true] %s195
          %s197 = sshll.u32 %s189, 4
          %s198 = int_to_ptr.vmem [resolvable:$true] %s197
          %203 = dma.hbm_to_vmem [thread:$0]  %s196, 384, %s198, %s186, 64, 64, 4
        $region32: #{tpu_custom_call.1} parent=27 // pred_fallthru
          _
      $region28: #{tpu_custom_call.1} parent=5 // pred_fallthru
        _
      %p204 = scmp.le.s32.totalorder 1, %s17
      %p205 = scmp.lt.s32.totalorder %s17, 3
      %p206 = pnand %p204, %p205
      %p207 = pneg %p206
      // Predicated region
      $region33: #{tpu_custom_call.1} parent=5 // pred_check
        _
      $region34: #{tpu_custom_call.1} parent=5 // pred_check_branch
        %209 = sbr.rel (%p206) target = $region36
      $region35: #{tpu_custom_call.1} parent=5 // pred_region
        %s210 = ssub.s32 %s17, 1
        %s211 = sand.u32 %s30, 1
        %s212 = scalar_lea.sflag [#allocation3], %s211
        %s213 = sand.u32 %s30, 1
        %s214 = smul.addr %s213, 24
        %s215 = scalar_lea.vmem [#allocation2], %s214
        // Predicated region
        $region37: #{tpu_custom_call.1} parent=35 // pred_check
          %p216 = pneg %p43
        $region38: #{tpu_custom_call.1} parent=35 // pred_check_branch
          %218 = sbr.rel (%p216) target = $region40
        $region39: #{tpu_custom_call.1} parent=35 // pred_region
          %220 = dma.done %s212, 384
        $region40: #{tpu_custom_call.1} parent=35 // pred_fallthru
          _
        // Predicated region
        $region41: #{tpu_custom_call.1} parent=35 // pred_check
          %p221 = pneg %p64
        $region42: #{tpu_custom_call.1} parent=35 // pred_check_branch
          %223 = sbr.rel (%p221) target = $region44
        $region43: #{tpu_custom_call.1} parent=35 // pred_region
          %225 = dma.done [#allocation6], 3072
        $region44: #{tpu_custom_call.1} parent=35 // pred_fallthru
          _
        // Predicated region
        $region45: #{tpu_custom_call.1} parent=35 // pred_check
          %p226 = pneg %p85
        $region46: #{tpu_custom_call.1} parent=35 // pred_check_branch
          %228 = sbr.rel (%p226) target = $region48
        $region47: #{tpu_custom_call.1} parent=35 // pred_region
          %230 = dma.done [#allocation6], 4096
        $region48: #{tpu_custom_call.1} parent=35 // pred_fallthru
          _
        %s231 = sand.u32 %s30, 1
        %s232 = scalar_lea.sflag [#allocation3], %s231
        %s233 = sand.u32 %s30, 1
        %s234 = smul.addr %s233, 24
        %s235 = scalar_lea.vmem [#allocation2], %s234
        %p236 = pneg %p43
        %p237 = pneg %p40
        %p238 = pneg %p64
        %p239 = pneg %p61
        %p240 = pneg %p85
        %p241 = pneg %p82
        %p242 = pneg %p106
        %p243 = pneg %p103
        %p244 = pneg %p132
        %p245 = pneg %p129
        %s246 = sand.u32 %s119, 1
        %s247 = scalar_lea.sflag [#allocation4], %s246
        %s248 = sand.u32 %s119, 1
        %s249 = smul.addr %s248, 16
        %s250 = scalar_lea.vmem [#allocation8], %s249
        %v252 = vld [vmem:[%s215] sm:$0xf]
        %v253 = vld [vmem:[%s215 + $0x4] sm:$0xf]
        %s254 = scalar_lea.vmem %s215, 8 [#allocation2]
        %v255 = vld [vmem:[%s254] sm:$0xf]
        %v256 = vld [vmem:[%s254 + $0x4] sm:$0xf]
        %s257 = scalar_lea.vmem %s215, 16 [#allocation2]
        %v258 = vld [vmem:[%s257] sm:$0xf]
        %v259 = vld [vmem:[%s257 + $0x4] sm:$0xf]
        %v262 = vunpack.c.l.b16 %v252
        %v263 = vunpack.c.l.b16 %v253
        %v264 = vpack.c.b16 %v263, %v262
        %v268 = vunpack.c.l.b16 %v255
        %v269 = vunpack.c.l.b16 %v256
        %v270 = vpack.c.b16 %v269, %v268
        %v274 = vunpack.c.l.b16 %v258
        %v275 = vunpack.c.l.b16 %v259
        %v276 = vpack.c.b16 %v275, %v274
        %v278 = vld [vmem:[#allocation5] sm:$0xf]
        %v279 = vld [vmem:[#allocation5 + $0x4] sm:$0xf]
        %v280 = vld [vmem:[#allocation5 + $0x8] sm:$0xf]
        %v281 = vld [vmem:[#allocation5 + $0xc] sm:$0xf]
        %v282 = vld [vmem:[#allocation5 + $0x10] sm:$0xf]
        %v283 = vld [vmem:[#allocation5 + $0x14] sm:$0xf]
        %v284 = vld [vmem:[#allocation5 + $0x18] sm:$0xf]
        %v285 = vld [vmem:[#allocation5 + $0x1c] sm:$0xf]
        %v286 = vld [vmem:[#allocation5 + $0x20] sm:$0xf]
        %v287 = vld [vmem:[#allocation5 + $0x24] sm:$0xf]
        %v288 = vld [vmem:[#allocation5 + $0x28] sm:$0xf]
        %v289 = vld [vmem:[#allocation5 + $0x2c] sm:$0xf]
        %v290 = vld [vmem:[#allocation5 + $0x30] sm:$0xf]
        %v291 = vld [vmem:[#allocation5 + $0x34] sm:$0xf]
        %v292 = vld [vmem:[#allocation5 + $0x38] sm:$0xf]
        %v293 = vld [vmem:[#allocation5 + $0x3c] sm:$0xf]
        %v294 = vld [vmem:[#allocation5 + $0x40] sm:$0xf]
        %v295 = vld [vmem:[#allocation5 + $0x44] sm:$0xf]
        %v296 = vld [vmem:[#allocation5 + $0x48] sm:$0xf]
        %v297 = vld [vmem:[#allocation5 + $0x4c] sm:$0xf]
        %v298 = vld [vmem:[#allocation5 + $0x50] sm:$0xf]
        %v299 = vld [vmem:[#allocation5 + $0x54] sm:$0xf]
        %v300 = vld [vmem:[#allocation5 + $0x58] sm:$0xf]
        %v301 = vld [vmem:[#allocation5 + $0x5c] sm:$0xf]
        %v302 = vld [vmem:[#allocation5 + $0x60] sm:$0xf]
        %v303 = vld [vmem:[#allocation5 + $0x64] sm:$0xf]
        %v304 = vld [vmem:[#allocation5 + $0x68] sm:$0xf]
        %v305 = vld [vmem:[#allocation5 + $0x6c] sm:$0xf]
        %v306 = vld [vmem:[#allocation5 + $0x70] sm:$0xf]
        %v307 = vld [vmem:[#allocation5 + $0x74] sm:$0xf]
        %v308 = vld [vmem:[#allocation5 + $0x78] sm:$0xf]
        %v309 = vld [vmem:[#allocation5 + $0x7c] sm:$0xf]
        %v310 = vld [vmem:[#allocation5 + $0x80] sm:$0xf]
        %v311 = vld [vmem:[#allocation5 + $0x84] sm:$0xf]
        %v312 = vld [vmem:[#allocation5 + $0x88] sm:$0xf]
        %v313 = vld [vmem:[#allocation5 + $0x8c] sm:$0xf]
        %v314 = vld [vmem:[#allocation5 + $0x90] sm:$0xf]
        %v315 = vld [vmem:[#allocation5 + $0x94] sm:$0xf]
        %v316 = vld [vmem:[#allocation5 + $0x98] sm:$0xf]
        %v317 = vld [vmem:[#allocation5 + $0x9c] sm:$0xf]
        %v318 = vld [vmem:[#allocation5 + $0xa0] sm:$0xf]
        %v319 = vld [vmem:[#allocation5 + $0xa4] sm:$0xf]
        %v320 = vld [vmem:[#allocation5 + $0xa8] sm:$0xf]
        %v321 = vld [vmem:[#allocation5 + $0xac] sm:$0xf]
        %v322 = vld [vmem:[#allocation5 + $0xb0] sm:$0xf]
        %v323 = vld [vmem:[#allocation5 + $0xb4] sm:$0xf]
        %v324 = vld [vmem:[#allocation5 + $0xb8] sm:$0xf]
        %v325 = vld [vmem:[#allocation5 + $0xbc] sm:$0xf]
        %v326 = vld [vmem:[%s3] sm:$0x1]
        %v327 = vperm.slane %v326, 0
        %v376 = vunpack.c.l.b16 %v278
        %v377 = vunpack.c.l.b16 %v279
        %v378 = vunpack.c.l.b16 %v280
        %v379 = vunpack.c.l.b16 %v281
        %v380 = vunpack.c.l.b16 %v282
        %v381 = vunpack.c.l.b16 %v283
        %v382 = vunpack.c.l.b16 %v284
        %v383 = vunpack.c.l.b16 %v285
        %v384 = vunpack.c.l.b16 %v286
        %v385 = vunpack.c.l.b16 %v287
        %v386 = vunpack.c.l.b16 %v288
        %v387 = vunpack.c.l.b16 %v289
        %v388 = vunpack.c.l.b16 %v290
        %v389 = vunpack.c.l.b16 %v291
        %v390 = vunpack.c.l.b16 %v292
        %v391 = vunpack.c.l.b16 %v293
        %v392 = vunpack.c.l.b16 %v294
        %v393 = vunpack.c.l.b16 %v295
        %v394 = vunpack.c.l.b16 %v296
        %v395 = vunpack.c.l.b16 %v297
        %v396 = vunpack.c.l.b16 %v298
        %v397 = vunpack.c.l.b16 %v299
        %v398 = vunpack.c.l.b16 %v300
        %v399 = vunpack.c.l.b16 %v301
        %v400 = vunpack.c.l.b16 %v302
        %v401 = vunpack.c.l.b16 %v303
        %v402 = vunpack.c.l.b16 %v304
        %v403 = vunpack.c.l.b16 %v305
        %v404 = vunpack.c.l.b16 %v306
        %v405 = vunpack.c.l.b16 %v307
        %v406 = vunpack.c.l.b16 %v308
        %v407 = vunpack.c.l.b16 %v309
        %v408 = vunpack.c.l.b16 %v310
        %v409 = vunpack.c.l.b16 %v311
        %v410 = vunpack.c.l.b16 %v312
        %v411 = vunpack.c.l.b16 %v313
        %v412 = vunpack.c.l.b16 %v314
        %v413 = vunpack.c.l.b16 %v315
        %v414 = vunpack.c.l.b16 %v316
        %v415 = vunpack.c.l.b16 %v317
        %v416 = vunpack.c.l.b16 %v318
        %v417 = vunpack.c.l.b16 %v319
        %v418 = vunpack.c.l.b16 %v320
        %v419 = vunpack.c.l.b16 %v321
        %v420 = vunpack.c.l.b16 %v322
        %v421 = vunpack.c.l.b16 %v323
        %v422 = vunpack.c.l.b16 %v324
        %v423 = vunpack.c.l.b16 %v325
        %v424 = vpack.c.b16 %v377, %v376
        %v425 = vpack.c.b16 %v379, %v378
        %v426 = vpack.c.b16 %v381, %v380
        %v427 = vpack.c.b16 %v383, %v382
        %v428 = vpack.c.b16 %v385, %v384
        %v429 = vpack.c.b16 %v387, %v386
        %v430 = vpack.c.b16 %v389, %v388
        %v431 = vpack.c.b16 %v391, %v390
        %v432 = vpack.c.b16 %v393, %v392
        %v433 = vpack.c.b16 %v395, %v394
        %v434 = vpack.c.b16 %v397, %v396
        %v435 = vpack.c.b16 %v399, %v398
        %v436 = vpack.c.b16 %v401, %v400
        %v437 = vpack.c.b16 %v403, %v402
        %v438 = vpack.c.b16 %v405, %v404
        %v439 = vpack.c.b16 %v407, %v406
        %v440 = vpack.c.b16 %v409, %v408
        %v441 = vpack.c.b16 %v411, %v410
        %v442 = vpack.c.b16 %v413, %v412
        %v443 = vpack.c.b16 %v415, %v414
        %v444 = vpack.c.b16 %v417, %v416
        %v445 = vpack.c.b16 %v419, %v418
        %v446 = vpack.c.b16 %v421, %v420
        %v447 = vpack.c.b16 %v423, %v422
        %472 = vmatpush.bf16.msra.mxu0 %v431
        %473 = vmatpush.bf16.msra.mxu0 %v430
        %474 = vmatpush.bf16.msra.mxu0 %v429
        %475 = vmatpush.bf16.msra.mxu0 %v428
        %476 = vmatpush.bf16.msra.mxu0 %v427
        %477 = vmatpush.bf16.msra.mxu0 %v426
        %478 = vmatpush.bf16.msra.mxu0 %v425
        %479 = vmatpush.bf16.msra.mxu0 %v424
        %480 = vmatmul.bf16.gmra.mxu0 %v264
        %v481 = vpop.f32.mrf.mxu0
        %v482 = vadd.f32 %v327, %v481
        %v483 = vpop.f32.mrf.mxu0
        %v484 = vadd.f32 %v327, %v483
        %485 = vdwg.mxu0
        %486 = vmatpush.bf16.msra.mxu0 %v439
        %487 = vmatpush.bf16.msra.mxu0 %v438
        %488 = vmatpush.bf16.msra.mxu0 %v437
        %489 = vmatpush.bf16.msra.mxu0 %v436
        %490 = vmatpush.bf16.msra.mxu0 %v435
        %491 = vmatpush.bf16.msra.mxu0 %v434
        %492 = vmatpush.bf16.msra.mxu0 %v433
        %493 = vmatpush.bf16.msra.mxu0 %v432
        %494 = vmatmul.bf16.gmra.mxu0 %v270
        %v495 = vpop.f32.mrf.mxu0
        %v496 = vadd.f32 %v482, %v495
        %v497 = vpop.f32.mrf.mxu0
        %v498 = vadd.f32 %v484, %v497
        %499 = vdwg.mxu0
        %500 = vmatpush.bf16.msra.mxu0 %v447
        %501 = vmatpush.bf16.msra.mxu0 %v446
        %502 = vmatpush.bf16.msra.mxu0 %v445
        %503 = vmatpush.bf16.msra.mxu0 %v444
        %504 = vmatpush.bf16.msra.mxu0 %v443
        %505 = vmatpush.bf16.msra.mxu0 %v442
        %506 = vmatpush.bf16.msra.mxu0 %v441
        %507 = vmatpush.bf16.msra.mxu0 %v440
        %508 = vmatmul.bf16.gmra.mxu0 %v276
        %v509 = vpop.f32.mrf.mxu0
        %v510 = vadd.f32 %v496, %v509
        %v511 = vpop.f32.mrf.mxu0
        %v512 = vadd.f32 %v498, %v511
        %513 = vdwg.mxu0
        %vm514 = vcmp.gt.f32.partialorder %v510, 0.0
        %vm515 = vcmp.gt.f32.partialorder %v512, 0.0
        %v516 = vmul.f32 %v510, 0.1
        %v517 = vmul.f32 %v512, 0.1
        %v518 = vsel %vm514, %v510, %v516
        %v519 = vsel %vm515, %v512, %v517
        %v520 = vpack.c.bf16 %v518, %v518
        %v521 = vpack.c.bf16 %v519, %v519
        %v524 = vunpack.c.l.b16 %v520
        %v525 = vunpack.c.l.b16 %v521
        %v526 = vpack.c.b16 %v525, %v524
        %v528 = vshrl.u32 %v526, 16
        %v530 = vrot.slane %v528, 7
        %v531 = vshll.u32 %v526, 16
        %v533 = vor.u32 %v530, %v531
        %vm536 = vcmask 1040384
        %vm537 = vsmask.f32 256
        %vm538 = vmand %vm536, %vm537
        %v539 = vsel %vm538, 0, %v533
        %v540 = vsel %vm538, %v530, 0
        %vm541 = vsmask.f32 7424
        %v543 = vshrl.u32 %v539, 16
        %v545 = vshll.u32 %v539, 16
        %v547 = vrot.slane %v545, 1
        %v548 = vor.u32 %v543, %v547
        %v550 = vshll.u32 %v540, 16
        %v552 = vrot.slane %v550, 1
        %v553 = vsel %vm541, %v548, %v552
        %vm557 = vcmask 1046528
        %v558 = vrot.slane %v539, 1
        %v559 = vrot.slane %v540, 1
        %v560 = vsel %vm557, %v558, %v559
        %v562 = vld [vmem:[#allocation7] sm:$0xf]
        %v563 = vld [vmem:[#allocation7 + $0x4] sm:$0xf]
        %v564 = vld [vmem:[#allocation7 + $0x8] sm:$0xf]
        %v565 = vld [vmem:[#allocation7 + $0xc] sm:$0xf]
        %v566 = vld [vmem:[#allocation7 + $0x10] sm:$0xf]
        %v567 = vld [vmem:[#allocation7 + $0x14] sm:$0xf]
        %v568 = vld [vmem:[#allocation7 + $0x18] sm:$0xf]
        %v569 = vld [vmem:[#allocation7 + $0x1c] sm:$0xf]
        %v570 = vld [vmem:[#allocation7 + $0x20] sm:$0xf]
        %v571 = vld [vmem:[#allocation7 + $0x24] sm:$0xf]
        %v572 = vld [vmem:[#allocation7 + $0x28] sm:$0xf]
        %v573 = vld [vmem:[#allocation7 + $0x2c] sm:$0xf]
        %v574 = vld [vmem:[#allocation7 + $0x30] sm:$0xf]
        %v575 = vld [vmem:[#allocation7 + $0x34] sm:$0xf]
        %v576 = vld [vmem:[#allocation7 + $0x38] sm:$0xf]
        %v577 = vld [vmem:[#allocation7 + $0x3c] sm:$0xf]
        %v578 = vld [vmem:[#allocation7 + $0x40] sm:$0xf]
        %v579 = vld [vmem:[#allocation7 + $0x44] sm:$0xf]
        %v580 = vld [vmem:[#allocation7 + $0x48] sm:$0xf]
        %v581 = vld [vmem:[#allocation7 + $0x4c] sm:$0xf]
        %v582 = vld [vmem:[#allocation7 + $0x50] sm:$0xf]
        %v583 = vld [vmem:[#allocation7 + $0x54] sm:$0xf]
        %v584 = vld [vmem:[#allocation7 + $0x58] sm:$0xf]
        %v585 = vld [vmem:[#allocation7 + $0x5c] sm:$0xf]
        %v586 = vld [vmem:[#allocation7 + $0x60] sm:$0xf]
        %v587 = vld [vmem:[#allocation7 + $0x64] sm:$0xf]
        %v588 = vld [vmem:[#allocation7 + $0x68] sm:$0xf]
        %v589 = vld [vmem:[#allocation7 + $0x6c] sm:$0xf]
        %v590 = vld [vmem:[#allocation7 + $0x70] sm:$0xf]
        %v591 = vld [vmem:[#allocation7 + $0x74] sm:$0xf]
        %v592 = vld [vmem:[#allocation7 + $0x78] sm:$0xf]
        %v593 = vld [vmem:[#allocation7 + $0x7c] sm:$0xf]
        %v594 = vld [vmem:[#allocation7 + $0x80] sm:$0xf]
        %v595 = vld [vmem:[#allocation7 + $0x84] sm:$0xf]
        %v596 = vld [vmem:[#allocation7 + $0x88] sm:$0xf]
        %v597 = vld [vmem:[#allocation7 + $0x8c] sm:$0xf]
        %v598 = vld [vmem:[#allocation7 + $0x90] sm:$0xf]
        %v599 = vld [vmem:[#allocation7 + $0x94] sm:$0xf]
        %v600 = vld [vmem:[#allocation7 + $0x98] sm:$0xf]
        %v601 = vld [vmem:[#allocation7 + $0x9c] sm:$0xf]
        %v602 = vld [vmem:[#allocation7 + $0xa0] sm:$0xf]
        %v603 = vld [vmem:[#allocation7 + $0xa4] sm:$0xf]
        %v604 = vld [vmem:[#allocation7 + $0xa8] sm:$0xf]
        %v605 = vld [vmem:[#allocation7 + $0xac] sm:$0xf]
        %v606 = vld [vmem:[#allocation7 + $0xb0] sm:$0xf]
        %v607 = vld [vmem:[#allocation7 + $0xb4] sm:$0xf]
        %v608 = vld [vmem:[#allocation7 + $0xb8] sm:$0xf]
        %v609 = vld [vmem:[#allocation7 + $0xbc] sm:$0xf]
        %v610 = vld [vmem:[#allocation7 + $0xc0] sm:$0xf]
        %v611 = vld [vmem:[#allocation7 + $0xc4] sm:$0xf]
        %v612 = vld [vmem:[#allocation7 + $0xc8] sm:$0xf]
        %v613 = vld [vmem:[#allocation7 + $0xcc] sm:$0xf]
        %v614 = vld [vmem:[#allocation7 + $0xd0] sm:$0xf]
        %v615 = vld [vmem:[#allocation7 + $0xd4] sm:$0xf]
        %v616 = vld [vmem:[#allocation7 + $0xd8] sm:$0xf]
        %v617 = vld [vmem:[#allocation7 + $0xdc] sm:$0xf]
        %v618 = vld [vmem:[#allocation7 + $0xe0] sm:$0xf]
        %v619 = vld [vmem:[#allocation7 + $0xe4] sm:$0xf]
        %v620 = vld [vmem:[#allocation7 + $0xe8] sm:$0xf]
        %v621 = vld [vmem:[#allocation7 + $0xec] sm:$0xf]
        %v622 = vld [vmem:[#allocation7 + $0xf0] sm:$0xf]
        %v623 = vld [vmem:[#allocation7 + $0xf4] sm:$0xf]
        %v624 = vld [vmem:[#allocation7 + $0xf8] sm:$0xf]
        %v625 = vld [vmem:[#allocation7 + $0xfc] sm:$0xf]
        %v626 = vld [vmem:[%s3 + $0x1] sm:$0x1]
        %v627 = vperm.slane %v626, 0
        %v692 = vunpack.c.l.b16 %v562
        %v693 = vunpack.c.l.b16 %v563
        %v694 = vunpack.c.l.b16 %v564
        %v695 = vunpack.c.l.b16 %v565
        %v696 = vunpack.c.l.b16 %v566
        %v697 = vunpack.c.l.b16 %v567
        %v698 = vunpack.c.l.b16 %v568
        %v699 = vunpack.c.l.b16 %v569
        %v700 = vunpack.c.l.b16 %v570
        %v701 = vunpack.c.l.b16 %v571
        %v702 = vunpack.c.l.b16 %v572
        %v703 = vunpack.c.l.b16 %v573
        %v704 = vunpack.c.l.b16 %v574
        %v705 = vunpack.c.l.b16 %v575
        %v706 = vunpack.c.l.b16 %v576
        %v707 = vunpack.c.l.b16 %v577
        %v708 = vunpack.c.l.b16 %v578
        %v709 = vunpack.c.l.b16 %v579
        %v710 = vunpack.c.l.b16 %v580
        %v711 = vunpack.c.l.b16 %v581
        %v712 = vunpack.c.l.b16 %v582
        %v713 = vunpack.c.l.b16 %v583
        %v714 = vunpack.c.l.b16 %v584
        %v715 = vunpack.c.l.b16 %v585
        %v716 = vunpack.c.l.b16 %v586
        %v717 = vunpack.c.l.b16 %v587
        %v718 = vunpack.c.l.b16 %v588
        %v719 = vunpack.c.l.b16 %v589
        %v720 = vunpack.c.l.b16 %v590
        %v721 = vunpack.c.l.b16 %v591
        %v722 = vunpack.c.l.b16 %v592
        %v723 = vunpack.c.l.b16 %v593
        %v724 = vunpack.c.l.b16 %v594
        %v725 = vunpack.c.l.b16 %v595
        %v726 = vunpack.c.l.b16 %v596
        %v727 = vunpack.c.l.b16 %v597
        %v728 = vunpack.c.l.b16 %v598
        %v729 = vunpack.c.l.b16 %v599
        %v730 = vunpack.c.l.b16 %v600
        %v731 = vunpack.c.l.b16 %v601
        %v732 = vunpack.c.l.b16 %v602
        %v733 = vunpack.c.l.b16 %v603
        %v734 = vunpack.c.l.b16 %v604
        %v735 = vunpack.c.l.b16 %v605
        %v736 = vunpack.c.l.b16 %v606
        %v737 = vunpack.c.l.b16 %v607
        %v738 = vunpack.c.l.b16 %v608
        %v739 = vunpack.c.l.b16 %v609
        %v740 = vunpack.c.l.b16 %v610
        %v741 = vunpack.c.l.b16 %v611
        %v742 = vunpack.c.l.b16 %v612
        %v743 = vunpack.c.l.b16 %v613
        %v744 = vunpack.c.l.b16 %v614
        %v745 = vunpack.c.l.b16 %v615
        %v746 = vunpack.c.l.b16 %v616
        %v747 = vunpack.c.l.b16 %v617
        %v748 = vunpack.c.l.b16 %v618
        %v749 = vunpack.c.l.b16 %v619
        %v750 = vunpack.c.l.b16 %v620
        %v751 = vunpack.c.l.b16 %v621
        %v752 = vunpack.c.l.b16 %v622
        %v753 = vunpack.c.l.b16 %v623
        %v754 = vunpack.c.l.b16 %v624
        %v755 = vunpack.c.l.b16 %v625
        %v756 = vpack.c.b16 %v693, %v692
        %v757 = vpack.c.b16 %v695, %v694
        %v758 = vpack.c.b16 %v697, %v696
        %v759 = vpack.c.b16 %v699, %v698
        %v760 = vpack.c.b16 %v701, %v700
        %v761 = vpack.c.b16 %v703, %v702
        %v762 = vpack.c.b16 %v705, %v704
        %v763 = vpack.c.b16 %v707, %v706
        %v764 = vpack.c.b16 %v709, %v708
        %v765 = vpack.c.b16 %v711, %v710
        %v766 = vpack.c.b16 %v713, %v712
        %v767 = vpack.c.b16 %v715, %v714
        %v768 = vpack.c.b16 %v717, %v716
        %v769 = vpack.c.b16 %v719, %v718
        %v770 = vpack.c.b16 %v721, %v720
        %v771 = vpack.c.b16 %v723, %v722
        %v772 = vpack.c.b16 %v725, %v724
        %v773 = vpack.c.b16 %v727, %v726
        %v774 = vpack.c.b16 %v729, %v728
        %v775 = vpack.c.b16 %v731, %v730
        %v776 = vpack.c.b16 %v733, %v732
        %v777 = vpack.c.b16 %v735, %v734
        %v778 = vpack.c.b16 %v737, %v736
        %v779 = vpack.c.b16 %v739, %v738
        %v780 = vpack.c.b16 %v741, %v740
        %v781 = vpack.c.b16 %v743, %v742
        %v782 = vpack.c.b16 %v745, %v744
        %v783 = vpack.c.b16 %v747, %v746
        %v784 = vpack.c.b16 %v749, %v748
        %v785 = vpack.c.b16 %v751, %v750
        %v786 = vpack.c.b16 %v753, %v752
        %v787 = vpack.c.b16 %v755, %v754
        %820 = vmatpush.bf16.msra.mxu0 %v763
        %821 = vmatpush.bf16.msra.mxu0 %v762
        %822 = vmatpush.bf16.msra.mxu0 %v761
        %823 = vmatpush.bf16.msra.mxu0 %v760
        %824 = vmatpush.bf16.msra.mxu0 %v759
        %825 = vmatpush.bf16.msra.mxu0 %v758
        %826 = vmatpush.bf16.msra.mxu0 %v757
        %827 = vmatpush.bf16.msra.mxu0 %v756
        %828 = vmatmul.bf16.gmra.mxu0 %v539
        %v829 = vpop.f32.mrf.mxu0
        %v830 = vadd.f32 %v627, %v829
        %v831 = vpop.f32.mrf.mxu0
        %v832 = vadd.f32 %v627, %v831
        %833 = vdwg.mxu0
        %834 = vmatpush.bf16.msra.mxu0 %v771
        %835 = vmatpush.bf16.msra.mxu0 %v770
        %836 = vmatpush.bf16.msra.mxu0 %v769
        %837 = vmatpush.bf16.msra.mxu0 %v768
        %838 = vmatpush.bf16.msra.mxu0 %v767
        %839 = vmatpush.bf16.msra.mxu0 %v766
        %840 = vmatpush.bf16.msra.mxu0 %v765
        %841 = vmatpush.bf16.msra.mxu0 %v764
        %842 = vmatmul.bf16.gmra.mxu0 %v553
        %v843 = vpop.f32.mrf.mxu0
        %v844 = vadd.f32 %v830, %v843
        %v845 = vpop.f32.mrf.mxu0
        %v846 = vadd.f32 %v832, %v845
        %847 = vdwg.mxu0
        %848 = vmatpush.bf16.msra.mxu0 %v779
        %849 = vmatpush.bf16.msra.mxu0 %v778
        %850 = vmatpush.bf16.msra.mxu0 %v777
        %851 = vmatpush.bf16.msra.mxu0 %v776
        %852 = vmatpush.bf16.msra.mxu0 %v775
        %853 = vmatpush.bf16.msra.mxu0 %v774
        %854 = vmatpush.bf16.msra.mxu0 %v773
        %855 = vmatpush.bf16.msra.mxu0 %v772
        %856 = vmatmul.bf16.gmra.mxu0 %v560
        %v857 = vpop.f32.mrf.mxu0
        %v858 = vadd.f32 %v844, %v857
        %v859 = vpop.f32.mrf.mxu0
        %v860 = vadd.f32 %v846, %v859
        %861 = vdwg.mxu0
        %862 = vmatpush.bf16.msra.mxu0 %v787
        %863 = vmatpush.bf16.msra.mxu0 %v786
        %864 = vmatpush.bf16.msra.mxu0 %v785
        %865 = vmatpush.bf16.msra.mxu0 %v784
        %866 = vmatpush.bf16.msra.mxu0 %v783
        %867 = vmatpush.bf16.msra.mxu0 %v782
        %868 = vmatpush.bf16.msra.mxu0 %v781
        %869 = vmatpush.bf16.msra.mxu0 %v780
        %870 = vmatmul.bf16.gmra.mxu0 %v270
        %v871 = vpop.f32.mrf.mxu0
        %v872 = vadd.f32 %v858, %v871
        %v873 = vpop.f32.mrf.mxu0
        %v874 = vadd.f32 %v860, %v873
        %875 = vdwg.mxu0
        %vm876 = vcmp.gt.f32.partialorder %v872, 0.0
        %vm877 = vcmp.gt.f32.partialorder %v874, 0.0
        %v878 = vmul.f32 %v872, 0.1
        %v879 = vmul.f32 %v874, 0.1
        %v880 = vsel %vm876, %v872, %v878
        %v881 = vsel %vm877, %v874, %v879
        %882 = vst [vmem:[%s250] sm:$0xff] %v880
        %883 = vst [vmem:[%s250 + $0x8] sm:$0xff] %v881
        %s884 = sand.u32 %s119, 1
        %s885 = scalar_lea.sflag [#allocation4], %s884
        %s886 = sand.u32 %s119, 1
        %s887 = smul.addr %s886, 16
        %s888 = scalar_lea.vmem [#allocation8], %s887
        // Predicated region
        $region49: #{tpu_custom_call.1} parent=35 // pred_check
          %p889 = pneg %p129
        $region50: #{tpu_custom_call.1} parent=35 // pred_check_branch
          %891 = sbr.rel (%p889) target = $region52
        $region51: #{tpu_custom_call.1} parent=35 // pred_region
          %893 = vsyncadd %s885, 0
          %s894 = smul.addr %s22, 2
          %s895 = smul.addr %s894, 8
          %s896 = scalar_lea.hbm %s4, %s895
          %s897 = sshll.u32 %s888, 4
          %s898 = int_to_ptr.vmem [resolvable:$true] %s897
          %s899 = sshll.u32 %s896, 4
          %s900 = int_to_ptr.hbm [resolvable:$true] %s899
          %905 = dma.vmem_to_hbm [thread:$0]  %s898, 256, %s900, %s885, 128, 128, 8
        $region52: #{tpu_custom_call.1} parent=35 // pred_fallthru
          _
      $region36: #{tpu_custom_call.1} parent=5 // pred_fallthru
        _
      %p906 = scmp.le.s32.totalorder 2, %s17
      // Predicated region
      $region53: #{tpu_custom_call.1} parent=5 // pred_check
        %p907 = pneg %p906
      $region54: #{tpu_custom_call.1} parent=5 // pred_check_branch
        %909 = sbr.rel (%p907) target = $region56
      $region55: #{tpu_custom_call.1} parent=5 // pred_region
        %s910 = ssub.s32 %s17, 2
        // Predicated region
        $region57: #{tpu_custom_call.1} parent=55 // pred_check
          %p911 = pneg %p135
        $region58: #{tpu_custom_call.1} parent=55 // pred_check_branch
          %913 = sbr.rel (%p911) target = $region60
        $region59: #{tpu_custom_call.1} parent=55 // pred_region
          %s914 = sand.u32 %s120, 1
          %s915 = scalar_lea.sflag [#allocation4], %s914
          %s916 = sand.u32 %s120, 1
          %s917 = smul.addr %s916, 16
          %s918 = scalar_lea.vmem [#allocation8], %s917
          %920 = dma.done %s915, 256
        $region60: #{tpu_custom_call.1} parent=55 // pred_fallthru
          _
      $region56: #{tpu_custom_call.1} parent=5 // pred_fallthru
        _
    $region6: #{tpu_custom_call.1} parent=1 // loop_footer
      %s21 = sadd.s32 1, %s17
    $region7: #{tpu_custom_call.1} parent=1 // loop_footer_branch
      %16 = sbr.rel target = $region3
    $region8: #{tpu_custom_call.1} parent=1 // loop_exit
      _
    %921 = vsyncpa [#allocation3], 1
    %s922 = scalar_lea.sflag [#allocation3], 1
    %923 = vsyncpa %s922, 1
    %924 = vsyncpa [#allocation6], 1
    %925 = vsyncpa [#allocation4], 1
    %s926 = scalar_lea.sflag [#allocation4], 1
    %927 = vsyncpa %s926, 1

</llo_original>
